<compile_context>
chip_gen: v6e
topology: v6e:2x2x1
jax: 0.10.0
libtpu: 0.0.40
codegen_flags: <defaults>
</compile_context>

<pallas_src>
import functools
import math

import jax
import jax.numpy as jnp
from jax import lax
from jax.experimental import pallas as pl
from jax.experimental.pallas import tpu as pltpu


def _round_up(v, m):
    return (v + m - 1) // m * m


def _pick_seq_tile(t, cap=128):
    """Largest sublane-friendly tile <= cap that divides t; falls back to full t."""
    for cand in (cap, 64, 32, 16, 8):
        if cand <= cap and t % cand == 0:
            return cand
    return t  # full-dim block is always legal


# -----------------------------------------------------------------------------
# Kernel 1: fused QKV projection into a head-major, lane-padded (Dpad) layout.
# -----------------------------------------------------------------------------
def _qkv_proj_kernel(x_ref, w_ref, b_ref, qkv_ref):
    # x_ref:   (1, TT, C)        f32   (cast to bf16 in-kernel for the MXU)
    # w_ref:   (C, 3*H*Dpad)     bf16  (block index constant -> stays resident)
    # b_ref:   (1, 3*H*Dpad)     f32
    # qkv_ref: (1, TT, 3*H*Dpad) bf16  (single wide, lane-dense store)
    x = x_ref[0].astype(jnp.bfloat16)
    acc = jnp.dot(x, w_ref[...], preferred_element_type=jnp.float32)
    qkv_ref[0] = (acc + b_ref[...]).astype(qkv_ref.dtype)


# -----------------------------------------------------------------------------
# Kernel 2: flash-style causal attention with online softmax.
# Grid: (B, H, num_q_tiles, num_kv_tiles); kv axis is the (arbitrary) reduction axis.
# -----------------------------------------------------------------------------
def _flash_attn_kernel(q_ref, k_ref, v_ref, o_ref, m_sc, l_sc, acc_sc,
                       *, scale, block_q, block_kv):
    qi = pl.program_id(2)
    ki = pl.program_id(3)

    @pl.when(ki == 0)
    def _init():
        m_sc[...] = jnp.full(m_sc.shape, -jnp.inf, dtype=jnp.float32)
        l_sc[...] = jnp.zeros(l_sc.shape, dtype=jnp.float32)
        acc_sc[...] = jnp.zeros(acc_sc.shape, dtype=jnp.float32)

    # Causal skip: with block_q == block_kv, kv tiles with ki > qi are fully masked.
    @pl.when(ki <= qi)
    def _update():
        q = q_ref[0]                                   # (Tq, Dpad) bf16
        k = k_ref[0]                                   # (Tkv, Dpad) bf16
        s = lax.dot_general(q, k, (((1,), (1,)), ((), ())),
                            preferred_element_type=jnp.float32) * scale   # (Tq, Tkv) f32

        # Causal mask with global indices; finite large-negative (safe for exp/underflow).
        row = qi * block_q + lax.broadcasted_iota(jnp.int32, s.shape, 0)
        col = ki * block_kv + lax.broadcasted_iota(jnp.int32, s.shape, 1)
        s = jnp.where(row >= col, s, -1e30)

        m_prev = m_sc[...]
        m_new = jnp.maximum(m_prev, jnp.max(s, axis=-1, keepdims=True))
        alpha = jnp.exp(m_prev - m_new)
        p = jnp.exp(s - m_new)

        l_sc[...] = alpha * l_sc[...] + jnp.sum(p, axis=-1, keepdims=True)
        acc_sc[...] = alpha * acc_sc[...] + jnp.dot(
            p.astype(jnp.bfloat16), v_ref[0], preferred_element_type=jnp.float32)
        m_sc[...] = m_new

    # The diagonal tile is the last tile that contributes to this q block -> finalize.
    @pl.when(ki == qi)
    def _finalize():
        inv_l = pl.reciprocal(l_sc[...], approx=True)
        o_ref[0] = (acc_sc[...] * inv_l).astype(o_ref.dtype)


# -----------------------------------------------------------------------------
# Wrapper
# -----------------------------------------------------------------------------
def attention_forward(x, weight, bias, num_head):
    """x: (B, T, C); weight: (3C, C) (PyTorch Linear layout); bias: (3C,)."""
    b, t, c = x.shape
    assert c % num_head == 0
    d = c // num_head
    dpad = max(128, _round_up(d, 128))      # lane-aligned head dim
    n3 = 3 * num_head * dpad

    # --- Pre-permute the Linear weight into (C_in, [q_h0..q_hH-1, k_h0.., v_h0..]) with
    # each head padded to Dpad lanes.  PyTorch channel layout: channel = d*H + h.
    wt = weight.T                                              # (C, 3C), col = s*C + d*H + h
    w4 = wt.reshape(c, 3, d, num_head).transpose(0, 1, 3, 2)   # (C, 3, H, D)
    w4 = jnp.pad(w4, ((0, 0), (0, 0), (0, 0), (0, dpad - d)))
    w_all = w4.reshape(c, n3).astype(jnp.bfloat16)

    b4 = bias.reshape(3, d, num_head).transpose(0, 2, 1)       # (3, H, D)
    b4 = jnp.pad(b4, ((0, 0), (0, 0), (0, dpad - d)))
    b_all = b4.reshape(1, n3).astype(jnp.float32)

    # --- Kernel 1: QKV projection ------------------------------------------------
    block_t = _pick_seq_tile(t)
    qkv = pl.pallas_call(
        _qkv_proj_kernel,
        out_shape=jax.ShapeDtypeStruct((b, t, n3), jnp.bfloat16),
        grid_spec=pltpu.PrefetchScalarGridSpec(
            num_scalar_prefetch=0,
            grid=(b, t // block_t),
            in_specs=[
                pl.BlockSpec((1, block_t, c), lambda bb, ti: (bb, ti, 0)),
                pl.BlockSpec((c, n3), lambda bb, ti: (0, 0)),
                pl.BlockSpec((1, n3), lambda bb, ti: (0, 0)),
            ],
            out_specs=pl.BlockSpec((1, block_t, n3), lambda bb, ti: (bb, ti, 0)),
        ),
        compiler_params=pltpu.CompilerParams(
            dimension_semantics=("parallel", "parallel")),
    )(x, w_all, b_all)

    # --- Kernel 2: flash attention over the head-major qkv array ------------------
    block_q = _pick_seq_tile(t)
    block_kv = block_q                      # required for the ki<=qi causal-skip logic
    nq = t // block_q
    h = num_head
    scale = 1.0 / math.sqrt(d)              # scale uses the *real* head dim

    kernel = functools.partial(_flash_attn_kernel, scale=scale,
                               block_q=block_q, block_kv=block_kv)
    o_pad = pl.pallas_call(
        kernel,
        out_shape=jax.ShapeDtypeStruct((b, t, h * dpad), x.dtype),
        grid_spec=pltpu.PrefetchScalarGridSpec(
            num_scalar_prefetch=0,
            grid=(b, h, nq, nq),
            in_specs=[
                # q / k / v are 128-lane column blocks of the same qkv array.
                pl.BlockSpec((1, block_q, dpad), lambda bb, hh, qi, ki: (bb, qi, hh)),
                pl.BlockSpec((1, block_kv, dpad), lambda bb, hh, qi, ki: (bb, ki, h + hh)),
                pl.BlockSpec((1, block_kv, dpad), lambda bb, hh, qi, ki: (bb, ki, 2 * h + hh)),
            ],
            out_specs=pl.BlockSpec((1, block_q, dpad), lambda bb, hh, qi, ki: (bb, qi, hh)),
            scratch_shapes=[
                pltpu.VMEM((block_q, 1), jnp.float32),       # running max
                pltpu.VMEM((block_q, 1), jnp.float32),       # running sum
                pltpu.VMEM((block_q, dpad), jnp.float32),    # output accumulator
            ],
        ),
        compiler_params=pltpu.CompilerParams(
            dimension_semantics=("parallel", "parallel", "parallel", "arbitrary")),
    )(qkv, qkv, qkv)

    # Restore the PyTorch channel interleaving (channel = d*H + h).  In a full model,
    # fold this fixed permutation into the consumer's weights instead of materializing it.
    o = o_pad.reshape(b, t, num_head, dpad)[..., :d]           # (B, T, H, D)
    return jnp.transpose(o, (0, 1, 3, 2)).reshape(b, t, c)


# -----------------------------------------------------------------------------
# Pure-JAX reference mirroring the PyTorch forward exactly (f32).
# -----------------------------------------------------------------------------
def attention_ref(x, weight, bias, num_head):
    b, t, c = x.shape
    d = c // num_head
    qkv = x @ weight.T + bias
    q, k, v = jnp.split(qkv, 3, axis=-1)

    def to_heads(z):
        return z.reshape(b, t, d, num_head).transpose(0, 3, 1, 2)   # (B, H, T, D)

    q, k, v = to_heads(q), to_heads(k), to_heads(v)
    s = jnp.einsum("bhqd,bhkd->bhqk", q, k) / math.sqrt(d)
    mask = jnp.tril(jnp.ones((t, t), dtype=bool))
    s = jnp.where(mask, s, -jnp.inf)
    p = jax.nn.softmax(s, axis=-1)
    o = jnp.einsum("bhqk,bhkd->bhqd", p, v)
    return o.transpose(0, 2, 3, 1).reshape(b, t, c)


if __name__ == "__main__":
    B, T, C, NUM_HEAD = 2, 8, 32, 4

    key = jax.random.PRNGKey(0)
    kx, kw, kb = jax.random.split(key, 3)
    x = jax.random.normal(kx, (B, T, C), dtype=jnp.float32)
    # Deterministic synthetic parameters matching nn.Linear(C, 3C): weight (3C, C), bias (3C,)
    bound = 1.0 / math.sqrt(C)
    weight = jax.random.uniform(kw, (3 * C, C), minval=-bound, maxval=bound, dtype=jnp.float32)
    bias = jax.random.uniform(kb, (3 * C,), minval=-bound, maxval=bound, dtype=jnp.float32)

    out = attention_forward(x, weight, bias, NUM_HEAD)
    out = jax.block_until_ready(out)

    ref = attention_ref(x, weight, bias, NUM_HEAD)
    assert out.shape == (B, T, C)
    # Kernel uses bf16 MXU operands with f32 accumulation -> compare with bf16-level tolerance.
    max_err = float(jnp.max(jnp.abs(out - ref)))
    assert max_err < 5e-2, f"mismatch vs pure-JAX reference (max abs err = {max_err})"

    print("KERNEL_OK")
</pallas_src>

<mosaic_0001>
module attributes {stable_mosaic.version = 11 : i64} {
  func.func @_qkv_proj_kernel(%arg0: i32, %arg1: i32, %arg2: memref<1x8x32xf32, #tpu.memory_space<vmem>>, %arg3: memref<32x1536xbf16, #tpu.memory_space<vmem>>, %arg4: memref<1x1536xf32, #tpu.memory_space<vmem>>, %arg5: memref<1x8x1536xbf16, #tpu.memory_space<vmem>>) attributes {dimension_semantics = [#tpu.dimension_semantics<parallel>, #tpu.dimension_semantics<parallel>], iteration_bounds = array<i64: 2, 1>, scalar_prefetch = 0 : i64, scratch_operands = 0 : i64, tpu.core_type = #tpu.core_type<tc>, window_params = [{transform_indices = @transform_0, window_bounds = array<i64: 1, 8, 32>}, {pipeline_mode = #tpu.pipeline_mode<synchronous>, transform_indices = @transform_1, window_bounds = array<i64: 32, 1536>}, {pipeline_mode = #tpu.pipeline_mode<synchronous>, transform_indices = @transform_2, window_bounds = array<i64: 1, 1536>}, {transform_indices = @transform_3, window_bounds = array<i64: 1, 8, 1536>}]} {
    %c0 = arith.constant 0 : index
    %c0_0 = arith.constant 0 : index
    %c0_1 = arith.constant 0 : index
    %0 = vector.load %arg2[%c0, %c0_0, %c0_1] : memref<1x8x32xf32, #tpu.memory_space<vmem>>, vector<1x8x32xf32>
    %1 = vector.shape_cast %0 : vector<1x8x32xf32> to vector<8x32xf32>
    %2 = arith.truncf %1 : vector<8x32xf32> to vector<8x32xbf16>
    %c0_2 = arith.constant 0 : index
    %c0_3 = arith.constant 0 : index
    %3 = vector.load %arg3[%c0_2, %c0_3] : memref<32x1536xbf16, #tpu.memory_space<vmem>>, vector<32x1536xbf16>
    %cst = arith.constant dense<0.000000e+00> : vector<8x1536xf32>
    %4 = tpu.matmul %2, %3, %cst {dimension_numbers = #tpu.dot_dimension_numbers<[1], [0], [0], [1], [0, 0, 1, 1], [], []>} : vector<8x32xbf16>, vector<32x1536xbf16>, vector<8x1536xf32> -> vector<8x1536xf32>
    %c0_4 = arith.constant 0 : index
    %c0_5 = arith.constant 0 : index
    %5 = vector.load %arg4[%c0_4, %c0_5] : memref<1x1536xf32, #tpu.memory_space<vmem>>, vector<1x1536xf32>
    %6 = vector.broadcast %5 : vector<1x1536xf32> to vector<8x1536xf32>
    %7 = arith.addf %4, %6 : vector<8x1536xf32>
    %8 = arith.truncf %7 : vector<8x1536xf32> to vector<8x1536xbf16>
    %c0_6 = arith.constant 0 : index
    %c0_7 = arith.constant 0 : index
    %c0_8 = arith.constant 0 : index
    %9 = vector.load %arg5[%c0_6, %c0_7, %c0_8] : memref<1x8x1536xbf16, #tpu.memory_space<vmem>>, vector<1x8x1536xbf16>
    %10 = vector.shape_cast %9 : vector<1x8x1536xbf16> to vector<8x1536xbf16>
    %11 = vector.shape_cast %8 : vector<8x1536xbf16> to vector<1x8x1536xbf16>
    tpu.vector_store %arg5[%c0_6, %c0_7, %c0_8], %11 {strides = array<i32>} : memref<1x8x1536xbf16, #tpu.memory_space<vmem>>, vector<1x8x1536xbf16>,
    return
  }
  func.func @transform_0(%arg0: i32, %arg1: i32) -> (i32, i32, i32) {
    %c0_i32 = arith.constant 0 : i32
    %c0_i32_0 = arith.constant 0 : i32
    return %arg0, %arg1, %c0_i32 : i32, i32, i32
  }
  func.func @transform_1(%arg0: i32, %arg1: i32) -> (i32, i32) {
    %c0_i32 = arith.constant 0 : i32
    %c0_i32_0 = arith.constant 0 : i32
    %c0_i32_1 = arith.constant 0 : i32
    return %c0_i32, %c0_i32_0 : i32, i32
  }
  func.func @transform_2(%arg0: i32, %arg1: i32) -> (i32, i32) {
    %c0_i32 = arith.constant 0 : i32
    %c0_i32_0 = arith.constant 0 : i32
    %c0_i32_1 = arith.constant 0 : i32
    return %c0_i32, %c0_i32_0 : i32, i32
  }
  func.func @transform_3(%arg0: i32, %arg1: i32) -> (i32, i32, i32) {
    %c0_i32 = arith.constant 0 : i32
    %c0_i32_0 = arith.constant 0 : i32
    return %arg0, %arg1, %c0_i32 : i32, i32, i32
  }
}

</mosaic_0001>

<llo_original>
// kernel: tpu_custom_call.1
$region0: #{tpu_custom_call.1}
  #allocation0 [shape = 'u32[]', space=smem, size = 0x4, offset = 0x4, fixed_abs, tag = 'smem constant byte address 0x4 - core index']
  #allocation1 [shape = 'u32[144,128]{1,0:T(1,128)}', space=vmem, size = 0x12000, scoped, tag = 'internal scratch']
  %s0 = inlined_call_operand.hbm [shape: f32[2,8,32], index: 0, kind: input, shape index: {}]
  %s1 = inlined_call_operand.hbm [shape: bf16[32,1536], index: 1, kind: input, shape index: {}]
  %s2 = inlined_call_operand.hbm [shape: f32[1,1536], index: 2, kind: input, shape index: {}]
  %s3 = inlined_call_operand.hbm [shape: bf16[2,8,1536], index: 3, kind: output, shape index: {}]
  %s4 = sld [smem:[#allocation0]]
  $region57: #{tpu_custom_call.1} parent=0
    _
  %s6 = ssub.s32 1, %s4
  %s7 = scalar_select 0, %s6, %s4
  $region1: #{tpu_custom_call.1} parent=0
    #allocation2 [shape = 'u8[8192]{0}', space=vmem, size = 0x2000, scoped, tag = 'input window, operand 0']
    #allocation3 [shape = 's32[2]{0}', space=sflag, size = 0x8, scoped, tag = 'scoped memory for tpu_custom_call.1']
    #allocation4 [shape = 's32[2]{0}', space=sflag, size = 0x8, scoped, tag = 'scoped memory for tpu_custom_call.1']
    #allocation5 [shape = 'u8[98304]{0}', space=vmem, size = 0x18000, scoped, tag = 'input window, operand 1, single buffered']
    #allocation6 [shape = 's32[1]{0}', space=sflag, size = 0x4, scoped, tag = 'scoped memory for tpu_custom_call.1']
    #allocation7 [shape = 'u8[6144]{0}', space=vmem, size = 0x1800, scoped, tag = 'input window, operand 2, single buffered']
    #allocation8 [shape = 'u8[49152]{0}', space=vmem, size = 0xc000, scoped, tag = 'output window, operand 0']
    %8 = vsyncpa [#allocation3], 0
    %s9 = scalar_lea.sflag [#allocation3], 1
    %10 = vsyncpa %s9, 0
    %11 = vsyncpa [#allocation6], 0
    %12 = vsyncpa [#allocation4], 0
    %s13 = scalar_lea.sflag [#allocation4], 1
    %14 = vsyncpa %s13, 0
    loop: start=0, step=1, limit=4
    $region2: #{tpu_custom_call.1} parent=1 // loop_pre_header
      _
    $region3: #{tpu_custom_call.1} parent=1 // loop_header
      %s16 = sphi 0, %s20
      %p17 = scmp.ge.s32.totalorder %s16, 4
      %s23 = sphi 0, %s35
      %s24 = sphi 0, %s31
      %s25 = sphi 0, %s23
      %s26 = sphi 0, %s24
      %s27 = sphi 0, %s25
      %s28 = sphi 0, %s26
      %s40 = sphi 0, %s42
      %s43 = sphi 0, %s40
      %s44 = sphi 0, %s43
      %s60 = sphi 0, %s44
      %s64 = sphi 0, %s64
      %s66 = sphi 0, %s64
      %s67 = sphi 0, %s66
      %s81 = sphi 0, %s67
      %s85 = sphi 0, %s85
      %s87 = sphi 0, %s85
      %s88 = sphi 0, %s87
      %s102 = sphi 0, %s88
      %s110 = sphi 0, %s112
      %s113 = sphi 0, %s110
      %s114 = sphi 0, %s113
      %s130 = sphi 0, %s114
    $region4: #{tpu_custom_call.1} parent=1 // loop_header_branch
      %19 = sbr.rel (%p17) target = $region8
    $region5: #{tpu_custom_call.1} parent=1 // loop_body
      %s21 = ssub.s32 %s16, 1
      %s22 = ssub.s32 %s16, 2
      %s29 = sadd.s32 1, %s24
      %p30 = scmp.ge.s32.totalorder %s29, 1
      %s31 = scalar_select %p30, 0, %s29
      %s32 = sadd.s32 1, %s23
      %s33 = scalar_select %p30, %s32, %s23
      %p34 = scmp.ge.s32.totalorder %s33, 2
      %s35 = scalar_select %p34, 0, %s33
      %s36 = ssub.s32 %s23, %s35
      %s37 = ssub.s32 %s24, %s31
      %s38 = sor.u32 %s36, %s37
      %p39 = scmp.eq.s32.totalorder %s38, 0
      %s41 = sadd.s32 %s40, 1
      %s42 = scalar_select %p39, %s40, %s41
      %p45 = pneg %p39
      %p46 = scmp.eq.s32.totalorder %s16, 1
      %p47 = por %p45, %p46
      %p48 = scmp.ne.s32.totalorder %s40, %s43
      %p49 = scmp.eq.s32.totalorder %s16, 0
      %p50 = por %p48, %p49
      %p51 = scmp.ne.s32.totalorder %s40, %s43
      %p52 = scmp.eq.s32.totalorder %s21, 1
      %p53 = por %p51, %p52
      %p54 = scmp.ne.s32.totalorder %s43, %s44
      %p55 = scmp.eq.s32.totalorder %s21, 0
      %p56 = por %p54, %p55
      %p57 = scmp.ne.s32.totalorder %s43, %s44
      %p58 = scmp.eq.s32.totalorder %s22, 1
      %p59 = por %p57, %p58
      %p61 = scmp.ne.s32.totalorder %s44, %s60
      %p62 = scmp.eq.s32.totalorder %s22, 0
      %p63 = por %p61, %p62
      %s65 = sadd.s32 %s64, 1
      %p68 = scmp.eq.s32.totalorder %s16, 1
      %p69 = scmp.ne.s32.totalorder %s64, %s66
      %p70 = scmp.eq.s32.totalorder %s16, 0
      %p71 = por %p69, %p70
      %p72 = scmp.ne.s32.totalorder %s64, %s66
      %p73 = scmp.eq.s32.totalorder %s21, 1
      %p74 = por %p72, %p73
      %p75 = scmp.ne.s32.totalorder %s66, %s67
      %p76 = scmp.eq.s32.totalorder %s21, 0
      %p77 = por %p75, %p76
      %p78 = scmp.ne.s32.totalorder %s66, %s67
      %p79 = scmp.eq.s32.totalorder %s22, 1
      %p80 = por %p78, %p79
      %p82 = scmp.ne.s32.totalorder %s67, %s81
      %p83 = scmp.eq.s32.totalorder %s22, 0
      %p84 = por %p82, %p83
      %s86 = sadd.s32 %s85, 1
      %p89 = scmp.eq.s32.totalorder %s16, 1
      %p90 = scmp.ne.s32.totalorder %s85, %s87
      %p91 = scmp.eq.s32.totalorder %s16, 0
      %p92 = por %p90, %p91
      %p93 = scmp.ne.s32.totalorder %s85, %s87
      %p94 = scmp.eq.s32.totalorder %s21, 1
      %p95 = por %p93, %p94
      %p96 = scmp.ne.s32.totalorder %s87, %s88
      %p97 = scmp.eq.s32.totalorder %s21, 0
      %p98 = por %p96, %p97
      %p99 = scmp.ne.s32.totalorder %s87, %s88
      %p100 = scmp.eq.s32.totalorder %s22, 1
      %p101 = por %p99, %p100
      %p103 = scmp.ne.s32.totalorder %s88, %s102
      %p104 = scmp.eq.s32.totalorder %s22, 0
      %p105 = por %p103, %p104
      %s106 = ssub.s32 %s23, %s35
      %s107 = ssub.s32 %s24, %s31
      %s108 = sor.u32 %s106, %s107
      %p109 = scmp.eq.s32.totalorder %s108, 0
      %s111 = sadd.s32 %s110, 1
      %s112 = scalar_select %p109, %s110, %s111
      %p115 = pneg %p109
      %p116 = scmp.eq.s32.totalorder %s16, 1
      %p117 = por %p115, %p116
      %p118 = scmp.ne.s32.totalorder %s110, %s113
      %p119 = scmp.eq.s32.totalorder %s16, 0
      %p120 = por %p118, %p119
      %p121 = scmp.ne.s32.totalorder %s110, %s113
      %p122 = scmp.eq.s32.totalorder %s21, 1
      %p123 = por %p121, %p122
      %p124 = scmp.ne.s32.totalorder %s113, %s114
      %p125 = scmp.eq.s32.totalorder %s21, 0
      %p126 = por %p124, %p125
      %p127 = scmp.ne.s32.totalorder %s113, %s114
      %p128 = scmp.eq.s32.totalorder %s22, 1
      %p129 = por %p127, %p128
      %p131 = scmp.ne.s32.totalorder %s114, %s130
      %p132 = scmp.eq.s32.totalorder %s22, 0
      %p133 = por %p131, %p132
      %p134 = scmp.le.s32.totalorder 1, %s16
      %p135 = scmp.lt.s32.totalorder %s16, 3
      %p136 = pnand %p134, %p135
      %p137 = pneg %p136
      // Predicated region
      $region9: #{tpu_custom_call.1} parent=5 // pred_check
        _
      $region10: #{tpu_custom_call.1} parent=5 // pred_check_branch
        %139 = sbr.rel (%p136) target = $region12
      $region11: #{tpu_custom_call.1} parent=5 // pred_region
        %s140 = ssub.s32 %s16, 1
        // Predicated region
        $region13: #{tpu_custom_call.1} parent=11 // pred_check
          %p141 = pneg %p77
        $region14: #{tpu_custom_call.1} parent=11 // pred_check_branch
          %143 = sbr.rel (%p141) target = $region16
        $region15: #{tpu_custom_call.1} parent=11 // pred_region
          %s145 = ssub.s32 3072, 3072
          %146 = vsyncadd [#allocation6], %s145
          %s147 = sshll.u32 [#allocation5], 4
          %s148 = int_to_ptr.vmem [resolvable:$true] %s147
          %153 = dma.hbm_to_vmem [thread:$0]  %s1, 3072, %s148, [#allocation6], 768, 768, 48
        $region16: #{tpu_custom_call.1} parent=11 // pred_fallthru
          _
        // Predicated region
        $region17: #{tpu_custom_call.1} parent=11 // pred_check
          %p154 = pneg %p98
        $region18: #{tpu_custom_call.1} parent=11 // pred_check_branch
          %156 = sbr.rel (%p154) target = $region20
        $region19: #{tpu_custom_call.1} parent=11 // pred_region
          %s158 = ssub.s32 192, 192
          %159 = vsyncadd [#allocation6], %s158
          %s161 = sshll.u32 [#allocation7], 4
          %s162 = int_to_ptr.vmem [resolvable:$true] %s161
          %164 = dma.hbm_to_vmem [thread:$0]  %s2, 192, %s162, [#allocation6]
        $region20: #{tpu_custom_call.1} parent=11 // pred_fallthru
          _
      $region12: #{tpu_custom_call.1} parent=5 // pred_fallthru
        _
      %p165 = scmp.lt.s32.totalorder %s16, 2
      // Predicated region
      $region21: #{tpu_custom_call.1} parent=5 // pred_check
        %p166 = pneg %p165
      $region22: #{tpu_custom_call.1} parent=5 // pred_check_branch
        %168 = sbr.rel (%p166) target = $region24
      $region23: #{tpu_custom_call.1} parent=5 // pred_region
        // Predicated region
        $region25: #{tpu_custom_call.1} parent=23 // pred_check
          %p169 = pneg %p50
        $region26: #{tpu_custom_call.1} parent=23 // pred_check_branch
          %171 = sbr.rel (%p169) target = $region28
        $region27: #{tpu_custom_call.1} parent=23 // pred_region
          %s172 = sand.u32 %s40, 1
          %s173 = scalar_lea.sflag [#allocation3], %s172
          %s174 = sand.u32 %s40, 1
          %s175 = smul.addr %s174, 8
          %s176 = scalar_lea.vmem [#allocation2], %s175
          %s178 = ssub.s32 128, 128
          %179 = vsyncadd %s173, %s178
          %s180 = sadd.s32 %s24, %s23
          %s181 = smul.addr %s180, 128
          %s182 = scalar_lea.hbm %s0, %s181
          %s184 = sshll.u32 %s176, 4
          %s185 = int_to_ptr.vmem [resolvable:$true] %s184
          %187 = dma.hbm_to_vmem [thread:$0]  %s182, 128, %s185, %s173
        $region28: #{tpu_custom_call.1} parent=23 // pred_fallthru
          _
      $region24: #{tpu_custom_call.1} parent=5 // pred_fallthru
        _
      %p188 = scmp.le.s32.totalorder 1, %s16
      %p189 = scmp.lt.s32.totalorder %s16, 3
      %p190 = pnand %p188, %p189
      %p191 = pneg %p190
      // Predicated region
      $region29: #{tpu_custom_call.1} parent=5 // pred_check
        _
      $region30: #{tpu_custom_call.1} parent=5 // pred_check_branch
        %193 = sbr.rel (%p190) target = $region32
      $region31: #{tpu_custom_call.1} parent=5 // pred_region
        %s194 = ssub.s32 %s16, 1
        %s195 = sand.u32 %s43, 1
        %s196 = scalar_lea.sflag [#allocation3], %s195
        %s197 = sand.u32 %s43, 1
        %s198 = smul.addr %s197, 8
        %s199 = scalar_lea.vmem [#allocation2], %s198
        // Predicated region
        $region33: #{tpu_custom_call.1} parent=31 // pred_check
          %p200 = pneg %p56
        $region34: #{tpu_custom_call.1} parent=31 // pred_check_branch
          %202 = sbr.rel (%p200) target = $region36
        $region35: #{tpu_custom_call.1} parent=31 // pred_region
          %203 = dma.done %s196, 128
        $region36: #{tpu_custom_call.1} parent=31 // pred_fallthru
          _
        // Predicated region
        $region37: #{tpu_custom_call.1} parent=31 // pred_check
          %p204 = pneg %p77
        $region38: #{tpu_custom_call.1} parent=31 // pred_check_branch
          %206 = sbr.rel (%p204) target = $region40
        $region39: #{tpu_custom_call.1} parent=31 // pred_region
          %207 = dma.done [#allocation6], 3072
        $region40: #{tpu_custom_call.1} parent=31 // pred_fallthru
          _
        // Predicated region
        $region41: #{tpu_custom_call.1} parent=31 // pred_check
          %p208 = pneg %p98
        $region42: #{tpu_custom_call.1} parent=31 // pred_check_branch
          %210 = sbr.rel (%p208) target = $region44
        $region43: #{tpu_custom_call.1} parent=31 // pred_region
          %211 = dma.done [#allocation6], 192
        $region44: #{tpu_custom_call.1} parent=31 // pred_fallthru
          _
        %s212 = sand.u32 %s43, 1
        %s213 = scalar_lea.sflag [#allocation3], %s212
        %s214 = sand.u32 %s43, 1
        %s215 = smul.addr %s214, 8
        %s216 = scalar_lea.vmem [#allocation2], %s215
        %p217 = pneg %p56
        %p218 = pneg %p53
        %p219 = pneg %p77
        %p220 = pneg %p74
        %p221 = pneg %p98
        %p222 = pneg %p95
        %p223 = pneg %p126
        %p224 = pneg %p123
        %s225 = sand.u32 %s113, 1
        %s226 = scalar_lea.sflag [#allocation4], %s225
        %s227 = sand.u32 %s113, 1
        %s228 = smul.addr %s227, 48
        %s229 = scalar_lea.vmem [#allocation8], %s228
        %v231 = vld [vmem:[%s199] sm:$0xff]
        %v232 = vpack.c.bf16 %v231, %v231
        %v233 = vld [vmem:[#allocation5] sm:$0xff]
        %v234 = vld [vmem:[#allocation5 + $0x8] sm:$0xff]
        %v235 = vld [vmem:[#allocation5 + $0x10] sm:$0xff]
        %v236 = vld [vmem:[#allocation5 + $0x18] sm:$0xff]
        %v237 = vld [vmem:[#allocation5 + $0x20] sm:$0xff]
        %v238 = vld [vmem:[#allocation5 + $0x28] sm:$0xff]
        %v239 = vld [vmem:[#allocation5 + $0x30] sm:$0xff]
        %v240 = vld [vmem:[#allocation5 + $0x38] sm:$0xff]
        %v241 = vld [vmem:[#allocation5 + $0x40] sm:$0xff]
        %v242 = vld [vmem:[#allocation5 + $0x48] sm:$0xff]
        %v243 = vld [vmem:[#allocation5 + $0x50] sm:$0xff]
        %v244 = vld [vmem:[#allocation5 + $0x58] sm:$0xff]
        %v245 = vld [vmem:[#allocation5 + $0x60] sm:$0xff]
        %v246 = vld [vmem:[#allocation5 + $0x68] sm:$0xff]
        %v247 = vld [vmem:[#allocation5 + $0x70] sm:$0xff]
        %v248 = vld [vmem:[#allocation5 + $0x78] sm:$0xff]
        %v249 = vld [vmem:[#allocation5 + $0x80] sm:$0xff]
        %v250 = vld [vmem:[#allocation5 + $0x88] sm:$0xff]
        %v251 = vld [vmem:[#allocation5 + $0x90] sm:$0xff]
        %v252 = vld [vmem:[#allocation5 + $0x98] sm:$0xff]
        %v253 = vld [vmem:[#allocation5 + $0xa0] sm:$0xff]
        %v254 = vld [vmem:[#allocation5 + $0xa8] sm:$0xff]
        %v255 = vld [vmem:[#allocation5 + $0xb0] sm:$0xff]
        %v256 = vld [vmem:[#allocation5 + $0xb8] sm:$0xff]
        %v257 = vld [vmem:[#allocation7] sm:$0xff]
        %v258 = vld [vmem:[#allocation7 + $0x8] sm:$0xf]
        %v261 = vlaneseq
        %v262 = vshrl.u32 %v261, 7
        %v263 = vsub.s32 0, %v262
        %v264 = vrot.slane %v257, %v263
        %v265 = vlaneseq
        %v266 = vshrl.u32 %v265, 7
        %v267 = vsub.s32 1, %v266
        %v268 = vrot.slane %v257, %v267
        %v269 = vlaneseq
        %v270 = vshrl.u32 %v269, 7
        %v271 = vsub.s32 2, %v270
        %v272 = vrot.slane %v257, %v271
        %v273 = vlaneseq
        %v274 = vshrl.u32 %v273, 7
        %v275 = vsub.s32 3, %v274
        %v276 = vrot.slane %v257, %v275
        %v277 = vlaneseq
        %v278 = vshrl.u32 %v277, 7
        %v279 = vsub.s32 4, %v278
        %v280 = vrot.slane %v257, %v279
        %v281 = vlaneseq
        %v282 = vshrl.u32 %v281, 7
        %v283 = vsub.s32 5, %v282
        %v284 = vrot.slane %v257, %v283
        %v285 = vlaneseq
        %v286 = vshrl.u32 %v285, 7
        %v287 = vsub.s32 6, %v286
        %v288 = vrot.slane %v257, %v287
        %v289 = vlaneseq
        %v290 = vshrl.u32 %v289, 7
        %v291 = vsub.s32 7, %v290
        %v292 = vrot.slane %v257, %v291
        %v293 = vlaneseq
        %v294 = vshrl.u32 %v293, 7
        %v295 = vsub.s32 0, %v294
        %v296 = vrot.slane %v258, %v295
        %v297 = vlaneseq
        %v298 = vshrl.u32 %v297, 7
        %v299 = vsub.s32 1, %v298
        %v300 = vrot.slane %v258, %v299
        %v301 = vlaneseq
        %v302 = vshrl.u32 %v301, 7
        %v303 = vsub.s32 2, %v302
        %v304 = vrot.slane %v258, %v303
        %v305 = vlaneseq
        %v306 = vshrl.u32 %v305, 7
        %v307 = vsub.s32 3, %v306
        %v308 = vrot.slane %v258, %v307
        %v345 = vunpack.c.l.b16 %v233
        %v346 = vunpack.c.h.b16 %v233
        %v347 = vunpack.c.l.b16 %v234
        %v348 = vunpack.c.h.b16 %v234
        %v349 = vunpack.c.l.b16 %v235
        %v350 = vunpack.c.h.b16 %v235
        %v351 = vunpack.c.l.b16 %v236
        %v352 = vunpack.c.h.b16 %v236
        %v353 = vunpack.c.l.b16 %v237
        %v354 = vunpack.c.h.b16 %v237
        %v355 = vunpack.c.l.b16 %v238
        %v356 = vunpack.c.h.b16 %v238
        %v357 = vunpack.c.l.b16 %v239
        %v358 = vunpack.c.h.b16 %v239
        %v359 = vunpack.c.l.b16 %v240
        %v360 = vunpack.c.h.b16 %v240
        %v361 = vunpack.c.l.b16 %v241
        %v362 = vunpack.c.h.b16 %v241
        %v363 = vunpack.c.l.b16 %v242
        %v364 = vunpack.c.h.b16 %v242
        %v365 = vunpack.c.l.b16 %v243
        %v366 = vunpack.c.h.b16 %v243
        %v367 = vunpack.c.l.b16 %v244
        %v368 = vunpack.c.h.b16 %v244
        %v369 = vunpack.c.l.b16 %v245
        %v370 = vunpack.c.h.b16 %v245
        %v371 = vunpack.c.l.b16 %v246
        %v372 = vunpack.c.h.b16 %v246
        %v373 = vunpack.c.l.b16 %v247
        %v374 = vunpack.c.h.b16 %v247
        %v375 = vunpack.c.l.b16 %v248
        %v376 = vunpack.c.h.b16 %v248
        %v377 = vunpack.c.l.b16 %v249
        %v378 = vunpack.c.h.b16 %v249
        %v379 = vunpack.c.l.b16 %v250
        %v380 = vunpack.c.h.b16 %v250
        %v381 = vunpack.c.l.b16 %v251
        %v382 = vunpack.c.h.b16 %v251
        %v383 = vunpack.c.l.b16 %v252
        %v384 = vunpack.c.h.b16 %v252
        %v385 = vunpack.c.l.b16 %v253
        %v386 = vunpack.c.h.b16 %v253
        %v387 = vunpack.c.l.b16 %v254
        %v388 = vunpack.c.h.b16 %v254
        %v389 = vunpack.c.l.b16 %v255
        %v390 = vunpack.c.h.b16 %v255
        %v391 = vunpack.c.l.b16 %v256
        %v392 = vunpack.c.h.b16 %v256
        %v393 = vpack.c.b16 %v357, %v345
        %v394 = vpack.c.b16 %v358, %v346
        %v395 = vpack.c.b16 %v359, %v347
        %v396 = vpack.c.b16 %v360, %v348
        %v397 = vpack.c.b16 %v361, %v349
        %v398 = vpack.c.b16 %v362, %v350
        %v399 = vpack.c.b16 %v363, %v351
        %v400 = vpack.c.b16 %v364, %v352
        %v401 = vpack.c.b16 %v365, %v353
        %v402 = vpack.c.b16 %v366, %v354
        %v403 = vpack.c.b16 %v367, %v355
        %v404 = vpack.c.b16 %v368, %v356
        %v405 = vpack.c.b16 %v381, %v369
        %v406 = vpack.c.b16 %v382, %v370
        %v407 = vpack.c.b16 %v383, %v371
        %v408 = vpack.c.b16 %v384, %v372
        %v409 = vpack.c.b16 %v385, %v373
        %v410 = vpack.c.b16 %v386, %v374
        %v411 = vpack.c.b16 %v387, %v375
        %v412 = vpack.c.b16 %v388, %v376
        %v413 = vpack.c.b16 %v389, %v377
        %v414 = vpack.c.b16 %v390, %v378
        %v415 = vpack.c.b16 %v391, %v379
        %v416 = vpack.c.b16 %v392, %v380
        %vm441 = vcmask 261120
        %v443 = vsel %vm441, %v232, 0
        %445 = vmatprep.subr.bf16.mxu0 0
        %446 = vmatpush1.bf16.msra.mxu0 0
        %447 = vmatprep.subr.bf16.mxu0 0
        %448 = vmatpush1.bf16.msra.mxu0 0
        %449 = vmatprep.subr.bf16.mxu0 0
        %450 = vmatpush1.bf16.msra.mxu0 0
        %451 = vmatprep.subr.bf16.mxu0 0
        %452 = vmatpush1.bf16.msra.mxu0 0
        %453 = vmatprep.subr.bf16.mxu0 0
        %454 = vmatpush1.bf16.msra.mxu0 0
        %455 = vmatprep.subr.bf16.mxu0 0
        %456 = vmatpush1.bf16.msra.mxu0 0
        %457 = vmatprep.subr.bf16.mxu0 %v406
        %458 = vmatpush1.bf16.msra.mxu0 %v405
        %459 = vmatprep.subr.bf16.mxu0 %v394
        %460 = vmatpush1.bf16.msra.mxu0 %v393
        %461 = vmatprep.subr.bf16.mxu0 0
        %462 = vmatpush2.bf16.msra.mxu0 0
        %463 = vmatprep.subr.bf16.mxu0 0
        %464 = vmatpush2.bf16.msra.mxu0 0
        %465 = vmatprep.subr.bf16.mxu0 0
        %466 = vmatpush2.bf16.msra.mxu0 0
        %467 = vmatprep.subr.bf16.mxu0 0
        %468 = vmatpush2.bf16.msra.mxu0 0
        %469 = vmatprep.subr.bf16.mxu0 0
        %470 = vmatpush2.bf16.msra.mxu0 0
        %471 = vmatprep.subr.bf16.mxu0 0
        %472 = vmatpush2.bf16.msra.mxu0 0
        %473 = vmatprep.subr.bf16.mxu0 0
        %474 = vmatpush2.bf16.msra.mxu0 0
        %475 = vmatprep.subr.bf16.mxu0 0
        %476 = vmatpush2.bf16.msra.mxu0 0
        %477 = vmatprep.mubr.bf16.mxu0 0
        %478 = vmatmul.mubr.bf16.gmra.mxu0 %v443
        %v479 = vpop.f32.mrf.mxu0
        %v480 = vadd.f32 %v264, %v479
        %v481 = vpop.f32.mrf.mxu0
        %v482 = vadd.f32 %v268, %v481
        %v483 = vpop.f32.mrf.mxu0
        %v484 = vpop.f32.mrf.mxu0
        %485 = vdwg.mxu0
        %486 = vmatprep.subr.bf16.mxu0 0
        %487 = vmatpush1.bf16.msra.mxu0 0
        %488 = vmatprep.subr.bf16.mxu0 0
        %489 = vmatpush1.bf16.msra.mxu0 0
        %490 = vmatprep.subr.bf16.mxu0 0
        %491 = vmatpush1.bf16.msra.mxu0 0
        %492 = vmatprep.subr.bf16.mxu0 0
        %493 = vmatpush1.bf16.msra.mxu0 0
        %494 = vmatprep.subr.bf16.mxu0 0
        %495 = vmatpush1.bf16.msra.mxu0 0
        %496 = vmatprep.subr.bf16.mxu0 0
        %497 = vmatpush1.bf16.msra.mxu0 0
        %498 = vmatprep.subr.bf16.mxu0 %v408
        %499 = vmatpush1.bf16.msra.mxu0 %v407
        %500 = vmatprep.subr.bf16.mxu0 %v396
        %501 = vmatpush1.bf16.msra.mxu0 %v395
        %502 = vmatprep.subr.bf16.mxu0 0
        %503 = vmatpush2.bf16.msra.mxu0 0
        %504 = vmatprep.subr.bf16.mxu0 0
        %505 = vmatpush2.bf16.msra.mxu0 0
        %506 = vmatprep.subr.bf16.mxu0 0
        %507 = vmatpush2.bf16.msra.mxu0 0
        %508 = vmatprep.subr.bf16.mxu0 0
        %509 = vmatpush2.bf16.msra.mxu0 0
        %510 = vmatprep.subr.bf16.mxu0 0
        %511 = vmatpush2.bf16.msra.mxu0 0
        %512 = vmatprep.subr.bf16.mxu0 0
        %513 = vmatpush2.bf16.msra.mxu0 0
        %514 = vmatprep.subr.bf16.mxu0 0
        %515 = vmatpush2.bf16.msra.mxu0 0
        %516 = vmatprep.subr.bf16.mxu0 0
        %517 = vmatpush2.bf16.msra.mxu0 0
        %518 = vmatprep.mubr.bf16.mxu0 0
        %519 = vmatmul.mubr.bf16.gmra.mxu0 %v443
        %v520 = vpop.f32.mrf.mxu0
        %v521 = vadd.f32 %v272, %v520
        %v522 = vpop.f32.mrf.mxu0
        %v523 = vadd.f32 %v276, %v522
        %v524 = vpop.f32.mrf.mxu0
        %v525 = vpop.f32.mrf.mxu0
        %526 = vdwg.mxu0
        %527 = vmatprep.subr.bf16.mxu0 0
        %528 = vmatpush1.bf16.msra.mxu0 0
        %529 = vmatprep.subr.bf16.mxu0 0
        %530 = vmatpush1.bf16.msra.mxu0 0
        %531 = vmatprep.subr.bf16.mxu0 0
        %532 = vmatpush1.bf16.msra.mxu0 0
        %533 = vmatprep.subr.bf16.mxu0 0
        %534 = vmatpush1.bf16.msra.mxu0 0
        %535 = vmatprep.subr.bf16.mxu0 0
        %536 = vmatpush1.bf16.msra.mxu0 0
        %537 = vmatprep.subr.bf16.mxu0 0
        %538 = vmatpush1.bf16.msra.mxu0 0
        %539 = vmatprep.subr.bf16.mxu0 %v410
        %540 = vmatpush1.bf16.msra.mxu0 %v409
        %541 = vmatprep.subr.bf16.mxu0 %v398
        %542 = vmatpush1.bf16.msra.mxu0 %v397
        %543 = vmatprep.subr.bf16.mxu0 0
        %544 = vmatpush2.bf16.msra.mxu0 0
        %545 = vmatprep.subr.bf16.mxu0 0
        %546 = vmatpush2.bf16.msra.mxu0 0
        %547 = vmatprep.subr.bf16.mxu0 0
        %548 = vmatpush2.bf16.msra.mxu0 0
        %549 = vmatprep.subr.bf16.mxu0 0
        %550 = vmatpush2.bf16.msra.mxu0 0
        %551 = vmatprep.subr.bf16.mxu0 0
        %552 = vmatpush2.bf16.msra.mxu0 0
        %553 = vmatprep.subr.bf16.mxu0 0
        %554 = vmatpush2.bf16.msra.mxu0 0
        %555 = vmatprep.subr.bf16.mxu0 0
        %556 = vmatpush2.bf16.msra.mxu0 0
        %557 = vmatprep.subr.bf16.mxu0 0
        %558 = vmatpush2.bf16.msra.mxu0 0
        %559 = vmatprep.mubr.bf16.mxu0 0
        %560 = vmatmul.mubr.bf16.gmra.mxu0 %v443
        %v561 = vpop.f32.mrf.mxu0
        %v562 = vadd.f32 %v280, %v561
        %v563 = vpop.f32.mrf.mxu0
        %v564 = vadd.f32 %v284, %v563
        %v565 = vpop.f32.mrf.mxu0
        %v566 = vpop.f32.mrf.mxu0
        %567 = vdwg.mxu0
        %568 = vmatprep.subr.bf16.mxu0 0
        %569 = vmatpush1.bf16.msra.mxu0 0
        %570 = vmatprep.subr.bf16.mxu0 0
        %571 = vmatpush1.bf16.msra.mxu0 0
        %572 = vmatprep.subr.bf16.mxu0 0
        %573 = vmatpush1.bf16.msra.mxu0 0
        %574 = vmatprep.subr.bf16.mxu0 0
        %575 = vmatpush1.bf16.msra.mxu0 0
        %576 = vmatprep.subr.bf16.mxu0 0
        %577 = vmatpush1.bf16.msra.mxu0 0
        %578 = vmatprep.subr.bf16.mxu0 0
        %579 = vmatpush1.bf16.msra.mxu0 0
        %580 = vmatprep.subr.bf16.mxu0 %v412
        %581 = vmatpush1.bf16.msra.mxu0 %v411
        %582 = vmatprep.subr.bf16.mxu0 %v400
        %583 = vmatpush1.bf16.msra.mxu0 %v399
        %584 = vmatprep.subr.bf16.mxu0 0
        %585 = vmatpush2.bf16.msra.mxu0 0
        %586 = vmatprep.subr.bf16.mxu0 0
        %587 = vmatpush2.bf16.msra.mxu0 0
        %588 = vmatprep.subr.bf16.mxu0 0
        %589 = vmatpush2.bf16.msra.mxu0 0
        %590 = vmatprep.subr.bf16.mxu0 0
        %591 = vmatpush2.bf16.msra.mxu0 0
        %592 = vmatprep.subr.bf16.mxu0 0
        %593 = vmatpush2.bf16.msra.mxu0 0
        %594 = vmatprep.subr.bf16.mxu0 0
        %595 = vmatpush2.bf16.msra.mxu0 0
        %596 = vmatprep.subr.bf16.mxu0 0
        %597 = vmatpush2.bf16.msra.mxu0 0
        %598 = vmatprep.subr.bf16.mxu0 0
        %599 = vmatpush2.bf16.msra.mxu0 0
        %600 = vmatprep.mubr.bf16.mxu0 0
        %601 = vmatmul.mubr.bf16.gmra.mxu0 %v443
        %v602 = vpop.f32.mrf.mxu0
        %v603 = vadd.f32 %v288, %v602
        %v604 = vpop.f32.mrf.mxu0
        %v605 = vadd.f32 %v292, %v604
        %v606 = vpop.f32.mrf.mxu0
        %v607 = vpop.f32.mrf.mxu0
        %608 = vdwg.mxu0
        %609 = vmatprep.subr.bf16.mxu0 0
        %610 = vmatpush1.bf16.msra.mxu0 0
        %611 = vmatprep.subr.bf16.mxu0 0
        %612 = vmatpush1.bf16.msra.mxu0 0
        %613 = vmatprep.subr.bf16.mxu0 0
        %614 = vmatpush1.bf16.msra.mxu0 0
        %615 = vmatprep.subr.bf16.mxu0 0
        %616 = vmatpush1.bf16.msra.mxu0 0
        %617 = vmatprep.subr.bf16.mxu0 0
        %618 = vmatpush1.bf16.msra.mxu0 0
        %619 = vmatprep.subr.bf16.mxu0 0
        %620 = vmatpush1.bf16.msra.mxu0 0
        %621 = vmatprep.subr.bf16.mxu0 %v414
        %622 = vmatpush1.bf16.msra.mxu0 %v413
        %623 = vmatprep.subr.bf16.mxu0 %v402
        %624 = vmatpush1.bf16.msra.mxu0 %v401
        %625 = vmatprep.subr.bf16.mxu0 0
        %626 = vmatpush2.bf16.msra.mxu0 0
        %627 = vmatprep.subr.bf16.mxu0 0
        %628 = vmatpush2.bf16.msra.mxu0 0
        %629 = vmatprep.subr.bf16.mxu0 0
        %630 = vmatpush2.bf16.msra.mxu0 0
        %631 = vmatprep.subr.bf16.mxu0 0
        %632 = vmatpush2.bf16.msra.mxu0 0
        %633 = vmatprep.subr.bf16.mxu0 0
        %634 = vmatpush2.bf16.msra.mxu0 0
        %635 = vmatprep.subr.bf16.mxu0 0
        %636 = vmatpush2.bf16.msra.mxu0 0
        %637 = vmatprep.subr.bf16.mxu0 0
        %638 = vmatpush2.bf16.msra.mxu0 0
        %639 = vmatprep.subr.bf16.mxu0 0
        %640 = vmatpush2.bf16.msra.mxu0 0
        %641 = vmatprep.mubr.bf16.mxu0 0
        %642 = vmatmul.mubr.bf16.gmra.mxu0 %v443
        %v643 = vpop.f32.mrf.mxu0
        %v644 = vadd.f32 %v296, %v643
        %v645 = vpop.f32.mrf.mxu0
        %v646 = vadd.f32 %v300, %v645
        %v647 = vpop.f32.mrf.mxu0
        %v648 = vpop.f32.mrf.mxu0
        %649 = vdwg.mxu0
        %650 = vmatprep.subr.bf16.mxu0 0
        %651 = vmatpush1.bf16.msra.mxu0 0
        %652 = vmatprep.subr.bf16.mxu0 0
        %653 = vmatpush1.bf16.msra.mxu0 0
        %654 = vmatprep.subr.bf16.mxu0 0
        %655 = vmatpush1.bf16.msra.mxu0 0
        %656 = vmatprep.subr.bf16.mxu0 0
        %657 = vmatpush1.bf16.msra.mxu0 0
        %658 = vmatprep.subr.bf16.mxu0 0
        %659 = vmatpush1.bf16.msra.mxu0 0
        %660 = vmatprep.subr.bf16.mxu0 0
        %661 = vmatpush1.bf16.msra.mxu0 0
        %662 = vmatprep.subr.bf16.mxu0 %v416
        %663 = vmatpush1.bf16.msra.mxu0 %v415
        %664 = vmatprep.subr.bf16.mxu0 %v404
        %665 = vmatpush1.bf16.msra.mxu0 %v403
        %666 = vmatprep.subr.bf16.mxu0 0
        %667 = vmatpush2.bf16.msra.mxu0 0
        %668 = vmatprep.subr.bf16.mxu0 0
        %669 = vmatpush2.bf16.msra.mxu0 0
        %670 = vmatprep.subr.bf16.mxu0 0
        %671 = vmatpush2.bf16.msra.mxu0 0
        %672 = vmatprep.subr.bf16.mxu0 0
        %673 = vmatpush2.bf16.msra.mxu0 0
        %674 = vmatprep.subr.bf16.mxu0 0
        %675 = vmatpush2.bf16.msra.mxu0 0
        %676 = vmatprep.subr.bf16.mxu0 0
        %677 = vmatpush2.bf16.msra.mxu0 0
        %678 = vmatprep.subr.bf16.mxu0 0
        %679 = vmatpush2.bf16.msra.mxu0 0
        %680 = vmatprep.subr.bf16.mxu0 0
        %681 = vmatpush2.bf16.msra.mxu0 0
        %682 = vmatprep.mubr.bf16.mxu0 0
        %683 = vmatmul.mubr.bf16.gmra.mxu0 %v443
        %v684 = vpop.f32.mrf.mxu0
        %v685 = vadd.f32 %v304, %v684
        %v686 = vpop.f32.mrf.mxu0
        %v687 = vadd.f32 %v308, %v686
        %v688 = vpop.f32.mrf.mxu0
        %v689 = vpop.f32.mrf.mxu0
        %690 = vdwg.mxu0
        %v691 = vpack.c.bf16 %v480, %v480
        %v692 = vpack.c.bf16 %v482, %v482
        %v693 = vpack.c.bf16 %v521, %v521
        %v694 = vpack.c.bf16 %v523, %v523
        %v695 = vpack.c.bf16 %v562, %v562
        %v696 = vpack.c.bf16 %v564, %v564
        %v697 = vpack.c.bf16 %v603, %v603
        %v698 = vpack.c.bf16 %v605, %v605
        %v699 = vpack.c.bf16 %v644, %v644
        %v700 = vpack.c.bf16 %v646, %v646
        %v701 = vpack.c.bf16 %v685, %v685
        %v702 = vpack.c.bf16 %v687, %v687
        %v715 = vunpack.c.l.b16 %v691
        %v716 = vunpack.c.l.b16 %v692
        %v717 = vunpack.c.l.b16 %v693
        %v718 = vunpack.c.l.b16 %v694
        %v719 = vunpack.c.l.b16 %v695
        %v720 = vunpack.c.l.b16 %v696
        %v721 = vunpack.c.l.b16 %v697
        %v722 = vunpack.c.l.b16 %v698
        %v723 = vunpack.c.l.b16 %v699
        %v724 = vunpack.c.l.b16 %v700
        %v725 = vunpack.c.l.b16 %v701
        %v726 = vunpack.c.l.b16 %v702
        %v727 = vpack.c.b16 %v716, %v715
        %v728 = vpack.c.b16 %v718, %v717
        %v729 = vpack.c.b16 %v720, %v719
        %v730 = vpack.c.b16 %v722, %v721
        %v731 = vpack.c.b16 %v724, %v723
        %v732 = vpack.c.b16 %v726, %v725
        %739 = vst [vmem:[%s229] sm:$0xff] %v727
        %740 = vst [vmem:[%s229 + $0x8] sm:$0xff] %v728
        %741 = vst [vmem:[%s229 + $0x10] sm:$0xff] %v729
        %742 = vst [vmem:[%s229 + $0x18] sm:$0xff] %v730
        %743 = vst [vmem:[%s229 + $0x20] sm:$0xff] %v731
        %744 = vst [vmem:[%s229 + $0x28] sm:$0xff] %v732
        %s745 = sand.u32 %s113, 1
        %s746 = scalar_lea.sflag [#allocation4], %s745
        %s747 = sand.u32 %s113, 1
        %s748 = smul.addr %s747, 48
        %s749 = scalar_lea.vmem [#allocation8], %s748
        // Predicated region
        $region45: #{tpu_custom_call.1} parent=31 // pred_check
          %p750 = pneg %p123
        $region46: #{tpu_custom_call.1} parent=31 // pred_check_branch
          %752 = sbr.rel (%p750) target = $region48
        $region47: #{tpu_custom_call.1} parent=31 // pred_region
          %s754 = ssub.s32 768, 768
          %755 = vsyncadd %s746, %s754
          %s756 = smul.addr %s26, 12
          %s757 = smul.addr %s25, 12
          %s758 = sadd.s32 %s756, %s757
          %s759 = smul.addr %s758, 64
          %s760 = scalar_lea.hbm %s3, %s759
          %s762 = sshll.u32 %s749, 4
          %s763 = int_to_ptr.vmem [resolvable:$true] %s762
          %765 = dma.vmem_to_hbm [thread:$0]  %s763, 768, %s760, %s746
        $region48: #{tpu_custom_call.1} parent=31 // pred_fallthru
          _
      $region32: #{tpu_custom_call.1} parent=5 // pred_fallthru
        _
      %p766 = scmp.le.s32.totalorder 2, %s16
      // Predicated region
      $region49: #{tpu_custom_call.1} parent=5 // pred_check
        %p767 = pneg %p766
      $region50: #{tpu_custom_call.1} parent=5 // pred_check_branch
        %769 = sbr.rel (%p767) target = $region52
      $region51: #{tpu_custom_call.1} parent=5 // pred_region
        %s770 = ssub.s32 %s16, 2
        // Predicated region
        $region53: #{tpu_custom_call.1} parent=51 // pred_check
          %p771 = pneg %p129
        $region54: #{tpu_custom_call.1} parent=51 // pred_check_branch
          %773 = sbr.rel (%p771) target = $region56
        $region55: #{tpu_custom_call.1} parent=51 // pred_region
          %s774 = sand.u32 %s114, 1
          %s775 = scalar_lea.sflag [#allocation4], %s774
          %s776 = sand.u32 %s114, 1
          %s777 = smul.addr %s776, 48
          %s778 = scalar_lea.vmem [#allocation8], %s777
          %779 = dma.done %s775, 768
        $region56: #{tpu_custom_call.1} parent=51 // pred_fallthru
          _
      $region52: #{tpu_custom_call.1} parent=5 // pred_fallthru
        _
    $region6: #{tpu_custom_call.1} parent=1 // loop_footer
      %s20 = sadd.s32 1, %s16
    $region7: #{tpu_custom_call.1} parent=1 // loop_footer_branch
      %15 = sbr.rel target = $region3
    $region8: #{tpu_custom_call.1} parent=1 // loop_exit
      _
    %780 = vsyncpa [#allocation3], 1
    %s781 = scalar_lea.sflag [#allocation3], 1
    %782 = vsyncpa %s781, 1
    %783 = vsyncpa [#allocation6], 1
    %784 = vsyncpa [#allocation4], 1
    %s785 = scalar_lea.sflag [#allocation4], 1
    %786 = vsyncpa %s785, 1

</llo_original>
